<compile_context>
chip_gen: v6e
topology: v6e:2x2x1
jax: 0.10.0
libtpu: 0.0.40
codegen_flags: <defaults>
</compile_context>

<pallas_src>
import functools
import math

import jax
import jax.numpy as jnp
from jax.experimental import pallas as pl
from jax.experimental.pallas import tpu as pltpu


def _round_up(x, m):
    return (x + m - 1) // m * m


# ---------------------------------------------------------------------------
# Kernel
# ---------------------------------------------------------------------------
def _twinq_kernel(s_ref, a_ref, w_ref, q_ref, *,
                  ni, na, P, off_w1s, off_w1a, off_w2, off_w3, off_b):
    """Fused twin-Q forward for one batch tile.

    s_ref : (bm, ni)    state tile
    a_ref : (bm, na)    action tile
    w_ref : (rows, P)   packed constant slab (layer-1/2/3 weights + biases),
                        P = 128-padded 2*hidden_dim.  Static sub-slices:
                          [off_w1s : off_w1s+ni]  rows of [W1 || W4] for state
                          [off_w1a : off_w1a+na]  rows of [W1 || W4] for action
                          [off_w2  : off_w2 +P ]  block-diag(W2, W5), padded
                          [off_w3  : off_w3 +P ]  block-diag(W3, W6) in cols 0:2
                          [off_b   : off_b  +3 ]  bias rows (b1||b4, b2||b5, [b3,b6])
    q_ref : (bm, 2)     merged output, col0 = q1, col1 = q2
    """
    # Layer 1 (both heads at once; concat avoided by splitting W1 by rows).
    h = (
        jnp.dot(s_ref[...], w_ref[off_w1s:off_w1s + ni, :],
                preferred_element_type=jnp.float32)
        + jnp.dot(a_ref[...], w_ref[off_w1a:off_w1a + na, :],
                  preferred_element_type=jnp.float32)
        + w_ref[off_b:off_b + 1, :]
    )
    h = jnp.maximum(h, 0.0)

    # Layer 2: block-diagonal keeps the two heads independent; padded lanes
    # stay exactly zero (zero weights, zero bias).
    h = (
        jnp.dot(h, w_ref[off_w2:off_w2 + P, :],
                preferred_element_type=jnp.float32)
        + w_ref[off_b + 1:off_b + 2, :]
    )
    h = jnp.maximum(h, 0.0)

    # Layer 3: (P, 2) -> both Q values in one merged tile.
    q = (
        jnp.dot(h, w_ref[off_w3:off_w3 + P, 0:2],
                preferred_element_type=jnp.float32)
        + w_ref[off_b + 2:off_b + 3, 0:2]
    )
    q_ref[...] = q.astype(q_ref.dtype)


# ---------------------------------------------------------------------------
# Wrapper
# ---------------------------------------------------------------------------
def qnetwork_forward(state, action, slab, meta, *, block_b=4096):
    """state: (B, num_inputs), action: (B, num_actions) -> (q1, q2), each (B, 1)."""
    B, ni = state.shape
    na = action.shape[1]
    assert ni == meta["ni"] and na == meta["na"]
    P = meta["P"]

    # Batch tiling:
    #  * tiny B (<= 8): one full-extent block (legal because block == array dim)
    #  * otherwise: at least 2 grid steps (so the 'parallel' axis shards across
    #    both TensorCores on v7x), capped at block_b rows per tile.
    if B <= 8:
        bm = B
    else:
        bm = min(block_b, max(8, _round_up(pl.cdiv(B, 2), 8)))
    grid = (pl.cdiv(B, bm),)

    kernel = functools.partial(_twinq_kernel, **meta)

    in_specs = [
        pl.BlockSpec((bm, ni), lambda i: (i, 0)),     # state tile
        pl.BlockSpec((bm, na), lambda i: (i, 0)),     # action tile
        # Constant index_map -> slab stays VMEM-resident across all batch tiles.
        pl.BlockSpec(slab.shape, lambda i: (0, 0)),
    ]
    out_spec = pl.BlockSpec((bm, 2), lambda i: (i, 0))

    flops = int(2 * B * (ni * P + na * P + P * P + P * 2))
    bytes_accessed = int(4 * (B * (ni + na + 2) + slab.size))
    cost = pl.CostEstimate(flops=flops, transcendentals=0,
                           bytes_accessed=bytes_accessed)

    q = pl.pallas_call(
        kernel,
        out_shape=jax.ShapeDtypeStruct((B, 2), jnp.float32),
        grid=grid,
        in_specs=in_specs,
        out_specs=out_spec,
        compiler_params=pltpu.CompilerParams(
            dimension_semantics=("parallel",),        # 2x on v7x megacore
            vmem_limit_bytes=32 * 1024 * 1024,        # large tiles OK on v5e/v7x
        ),
        cost_estimate=cost,
    )(state, action, slab)
    return q[:, 0:1], q[:, 1:2]


# ---------------------------------------------------------------------------
# Parameter init (PyTorch-equivalent) and fused packing
# ---------------------------------------------------------------------------
def xavier_uniform(key, fan_in, fan_out, gain=1.0):
    """torch.nn.init.xavier_uniform_ on a (out, in) weight, returned as (in, out)."""
    bound = gain * math.sqrt(6.0 / (fan_in + fan_out))
    w = jax.random.uniform(key, (fan_out, fan_in), jnp.float32, -bound, bound)
    return w.T  # store as (in, out) for x @ W


def init_qnetwork_params(key, num_inputs, num_actions, hidden_dim):
    in_dim = num_inputs + num_actions
    keys = jax.random.split(key, 6)
    return {
        "w1": xavier_uniform(keys[0], in_dim, hidden_dim),
        "b1": jnp.zeros((1, hidden_dim), jnp.float32),
        "w2": xavier_uniform(keys[1], hidden_dim, hidden_dim),
        "b2": jnp.zeros((1, hidden_dim), jnp.float32),
        "w3": xavier_uniform(keys[2], hidden_dim, 1),
        "b3": jnp.zeros((1, 1), jnp.float32),
        "w4": xavier_uniform(keys[3], in_dim, hidden_dim),
        "b4": jnp.zeros((1, hidden_dim), jnp.float32),
        "w5": xavier_uniform(keys[4], hidden_dim, hidden_dim),
        "b5": jnp.zeros((1, hidden_dim), jnp.float32),
        "w6": xavier_uniform(keys[5], hidden_dim, 1),
        "b6": jnp.zeros((1, 1), jnp.float32),
    }


def pack_qnetwork_params(p, num_inputs, num_actions):
    """Fuse the twin heads and pack every constant into ONE zero-padded slab.

    Done once at init/update time; the kernel takes static sub-views.
    NOTE: the block-diag W2 trick is only a win while 2*H fits a single MXU
    tile (H <= 128); for larger hidden dims switch layer 2 back to two per-head
    HxH dots.
    """
    H = p["w1"].shape[1]
    twoH = 2 * H
    P = max(128, _round_up(twoH, 128))   # lane-dense hidden width
    ni, na = num_inputs, num_actions

    # 8-sublane-aligned row offsets for each segment.
    off_w1s = 0
    off_w1a = _round_up(off_w1s + ni, 8)
    off_w2 = _round_up(off_w1a + na, 8)
    off_w3 = off_w2 + P
    off_b = off_w3 + P
    rows = _round_up(off_b + 3, 8)

    slab = jnp.zeros((rows, P), jnp.float32)

    # Layer 1: [W1 || W4], split by state/action rows (avoids any concat).
    w1 = jnp.concatenate([p["w1"], p["w4"]], axis=1)              # (ni+na, 2H)
    slab = slab.at[off_w1s:off_w1s + ni, 0:twoH].set(w1[:ni])
    slab = slab.at[off_w1a:off_w1a + na, 0:twoH].set(w1[ni:])

    # Layer 2: block-diag(W2, W5), zero-padded to (P, P).
    slab = slab.at[off_w2:off_w2 + H, 0:H].set(p["w2"])
    slab = slab.at[off_w2 + H:off_w2 + twoH, H:twoH].set(p["w5"])

    # Layer 3: block-diag(W3, W6) -> columns [q1, q2].
    slab = slab.at[off_w3:off_w3 + H, 0:1].set(p["w3"])
    slab = slab.at[off_w3 + H:off_w3 + twoH, 1:2].set(p["w6"])

    # Biases: row0 = [b1||b4], row1 = [b2||b5], row2 = [b3, b6, 0...].
    slab = slab.at[off_b, 0:H].set(p["b1"][0])
    slab = slab.at[off_b, H:twoH].set(p["b4"][0])
    slab = slab.at[off_b + 1, 0:H].set(p["b2"][0])
    slab = slab.at[off_b + 1, H:twoH].set(p["b5"][0])
    slab = slab.at[off_b + 2, 0].set(p["b3"][0, 0])
    slab = slab.at[off_b + 2, 1].set(p["b6"][0, 0])

    meta = dict(ni=ni, na=na, P=P, off_w1s=off_w1s, off_w1a=off_w1a,
                off_w2=off_w2, off_w3=off_w3, off_b=off_b)
    return slab, meta


# ---------------------------------------------------------------------------
# Pure-JAX reference (unfused, mirrors the PyTorch module)
# ---------------------------------------------------------------------------
def qnetwork_ref(state, action, p):
    xu = jnp.concatenate([state, action], axis=1)
    h1 = jax.nn.relu(xu @ p["w1"] + p["b1"])
    h1 = jax.nn.relu(h1 @ p["w2"] + p["b2"])
    q1 = h1 @ p["w3"] + p["b3"]
    h2 = jax.nn.relu(xu @ p["w4"] + p["b4"])
    h2 = jax.nn.relu(h2 @ p["w5"] + p["b5"])
    q2 = h2 @ p["w6"] + p["b6"]
    return q1, q2


if __name__ == "__main__":
    num_inputs, num_actions, hidden_dim = 8, 4, 32

    key = jax.random.PRNGKey(0)
    k_params, k_state, k_action = jax.random.split(key, 3)

    params = init_qnetwork_params(k_params, num_inputs, num_actions, hidden_dim)
    slab, meta = pack_qnetwork_params(params, num_inputs, num_actions)

    # Case 1: tiny batch (single full-extent block).
    batch = 2
    state = jax.random.normal(k_state, (batch, num_inputs), jnp.float32)
    action = jax.random.normal(k_action, (batch, num_actions), jnp.float32)

    q1, q2 = qnetwork_forward(state, action, slab, meta)
    q1 = jax.block_until_ready(q1)
    q2 = jax.block_until_ready(q2)

    q1_ref, q2_ref = qnetwork_ref(state, action, params)
    assert q1.shape == (batch, 1) and q2.shape == (batch, 1)
    assert jnp.allclose(q1, q1_ref, atol=1e-4, rtol=1e-4)
    assert jnp.allclose(q2, q2_ref, atol=1e-4, rtol=1e-4)

    # Case 2: batch that exercises the >=2-step grid and a ragged edge block.
    batch2 = 20
    ks2, ka2 = jax.random.split(k_state)
    state2 = jax.random.normal(ks2, (batch2, num_inputs), jnp.float32)
    action2 = jax.random.normal(ka2, (batch2, num_actions), jnp.float32)

    q1b, q2b = qnetwork_forward(state2, action2, slab, meta)
    q1b = jax.block_until_ready(q1b)
    q2b = jax.block_until_ready(q2b)

    q1b_ref, q2b_ref = qnetwork_ref(state2, action2, params)
    assert jnp.allclose(q1b, q1b_ref, atol=1e-4, rtol=1e-4)
    assert jnp.allclose(q2b, q2b_ref, atol=1e-4, rtol=1e-4)

    print("KERNEL_OK")
</pallas_src>

<mosaic_0001>
module attributes {stable_mosaic.version = 11 : i64} {
  func.func @_twinq_kernel(%arg0: i32, %arg1: memref<2x8xf32, #tpu.memory_space<vmem>>, %arg2: memref<2x4xf32, #tpu.memory_space<vmem>>, %arg3: memref<280x128xf32, #tpu.memory_space<vmem>>, %arg4: memref<2x2xf32, #tpu.memory_space<vmem>>) attributes {dimension_semantics = [#tpu.dimension_semantics<parallel>], iteration_bounds = array<i64: 1>, scalar_prefetch = 0 : i64, scratch_operands = 0 : i64, tpu.core_type = #tpu.core_type<tc>, window_params = [{transform_indices = @transform_0, window_bounds = array<i64: 2, 8>}, {transform_indices = @transform_1, window_bounds = array<i64: 2, 4>}, {pipeline_mode = #tpu.pipeline_mode<synchronous>, transform_indices = @transform_2, window_bounds = array<i64: 280, 128>}, {transform_indices = @transform_3, window_bounds = array<i64: 2, 2>}]} {
    %c0 = arith.constant 0 : index
    %c0_0 = arith.constant 0 : index
    %0 = vector.load %arg1[%c0, %c0_0] : memref<2x8xf32, #tpu.memory_space<vmem>>, vector<2x8xf32>
    %c0_1 = arith.constant 0 : index
    %c0_2 = arith.constant 0 : index
    %1 = vector.load %arg3[%c0_1, %c0_2] : memref<280x128xf32, #tpu.memory_space<vmem>>, vector<8x128xf32>
    %cst = arith.constant dense<0.000000e+00> : vector<2x128xf32>
    %2 = tpu.matmul %0, %1, %cst {dimension_numbers = #tpu.dot_dimension_numbers<[1], [0], [0], [1], [0, 0, 1, 1], [], []>} : vector<2x8xf32>, vector<8x128xf32>, vector<2x128xf32> -> vector<2x128xf32>
    %c0_3 = arith.constant 0 : index
    %c0_4 = arith.constant 0 : index
    %3 = vector.load %arg2[%c0_3, %c0_4] : memref<2x4xf32, #tpu.memory_space<vmem>>, vector<2x4xf32>
    %c8 = arith.constant 8 : index
    %c0_5 = arith.constant 0 : index
    %4 = vector.load %arg3[%c8, %c0_5] : memref<280x128xf32, #tpu.memory_space<vmem>>, vector<4x128xf32>
    %cst_6 = arith.constant dense<0.000000e+00> : vector<2x128xf32>
    %5 = tpu.matmul %3, %4, %cst_6 {dimension_numbers = #tpu.dot_dimension_numbers<[1], [0], [0], [1], [0, 0, 1, 1], [], []>} : vector<2x4xf32>, vector<4x128xf32>, vector<2x128xf32> -> vector<2x128xf32>
    %6 = arith.addf %2, %5 : vector<2x128xf32>
    %c272 = arith.constant 272 : index
    %c0_7 = arith.constant 0 : index
    %7 = vector.load %arg3[%c272, %c0_7] : memref<280x128xf32, #tpu.memory_space<vmem>>, vector<1x128xf32>
    %8 = vector.broadcast %7 : vector<1x128xf32> to vector<2x128xf32>
    %9 = arith.addf %6, %8 : vector<2x128xf32>
    %cst_8 = arith.constant 0.000000e+00 : f32
    %10 = vector.broadcast %cst_8 : f32 to vector<2x128xf32>
    %11 = arith.maximumf %9, %10 : vector<2x128xf32>
    %c16 = arith.constant 16 : index
    %c0_9 = arith.constant 0 : index
    %12 = vector.load %arg3[%c16, %c0_9] : memref<280x128xf32, #tpu.memory_space<vmem>>, vector<128x128xf32>
    %cst_10 = arith.constant dense<0.000000e+00> : vector<2x128xf32>
    %13 = tpu.matmul %11, %12, %cst_10 {dimension_numbers = #tpu.dot_dimension_numbers<[1], [0], [0], [1], [0, 0, 1, 1], [], []>} : vector<2x128xf32>, vector<128x128xf32>, vector<2x128xf32> -> vector<2x128xf32>
    %c273 = arith.constant 273 : index
    %c0_11 = arith.constant 0 : index
    %14 = vector.load %arg3[%c273, %c0_11] : memref<280x128xf32, #tpu.memory_space<vmem>>, vector<1x128xf32>
    %15 = vector.broadcast %14 : vector<1x128xf32> to vector<2x128xf32>
    %16 = arith.addf %13, %15 : vector<2x128xf32>
    %cst_12 = arith.constant 0.000000e+00 : f32
    %17 = vector.broadcast %cst_12 : f32 to vector<2x128xf32>
    %18 = arith.maximumf %16, %17 : vector<2x128xf32>
    %c144 = arith.constant 144 : index
    %c0_13 = arith.constant 0 : index
    %19 = vector.load %arg3[%c144, %c0_13] : memref<280x128xf32, #tpu.memory_space<vmem>>, vector<128x2xf32>
    %cst_14 = arith.constant dense<0.000000e+00> : vector<2x2xf32>
    %20 = tpu.matmul %18, %19, %cst_14 {dimension_numbers = #tpu.dot_dimension_numbers<[1], [0], [0], [1], [0, 0, 1, 1], [], []>} : vector<2x128xf32>, vector<128x2xf32>, vector<2x2xf32> -> vector<2x2xf32>
    %c274 = arith.constant 274 : index
    %c0_15 = arith.constant 0 : index
    %21 = vector.load %arg3[%c274, %c0_15] : memref<280x128xf32, #tpu.memory_space<vmem>>, vector<1x2xf32>
    %22 = vector.broadcast %21 : vector<1x2xf32> to vector<2x2xf32>
    %23 = arith.addf %20, %22 : vector<2x2xf32>
    %c0_16 = arith.constant 0 : index
    %c0_17 = arith.constant 0 : index
    %24 = vector.load %arg4[%c0_16, %c0_17] : memref<2x2xf32, #tpu.memory_space<vmem>>, vector<2x2xf32>
    tpu.vector_store %arg4[%c0_16, %c0_17], %23 {strides = array<i32>} : memref<2x2xf32, #tpu.memory_space<vmem>>, vector<2x2xf32>,
    return
  }
  func.func @transform_0(%arg0: i32) -> (i32, i32) {
    %c0_i32 = arith.constant 0 : i32
    %c0_i32_0 = arith.constant 0 : i32
    return %arg0, %c0_i32 : i32, i32
  }
  func.func @transform_1(%arg0: i32) -> (i32, i32) {
    %c0_i32 = arith.constant 0 : i32
    %c0_i32_0 = arith.constant 0 : i32
    return %arg0, %c0_i32 : i32, i32
  }
  func.func @transform_2(%arg0: i32) -> (i32, i32) {
    %c0_i32 = arith.constant 0 : i32
    %c0_i32_0 = arith.constant 0 : i32
    %c0_i32_1 = arith.constant 0 : i32
    return %c0_i32, %c0_i32_0 : i32, i32
  }
  func.func @transform_3(%arg0: i32) -> (i32, i32) {
    %c0_i32 = arith.constant 0 : i32
    %c0_i32_0 = arith.constant 0 : i32
    return %arg0, %c0_i32 : i32, i32
  }
}

</mosaic_0001>

<llo_original>
// kernel: tpu_custom_call.1
$region0: #{tpu_custom_call.1}
  #allocation0 [shape = 'u32[]', space=smem, size = 0x4, offset = 0x4, fixed_abs, tag = 'smem constant byte address 0x4 - core index']
  #allocation1 [shape = 'u32[144,128]{1,0:T(1,128)}', space=vmem, size = 0x12000, scoped, tag = 'internal scratch']
  %s0 = inlined_call_operand.hbm [shape: f32[2,8], index: 0, kind: input, shape index: {}]
  %s1 = inlined_call_operand.hbm [shape: f32[2,4], index: 1, kind: input, shape index: {}]
  %s2 = inlined_call_operand.hbm [shape: f32[280,128], index: 2, kind: input, shape index: {}]
  %s3 = inlined_call_operand.hbm [shape: f32[2,2], index: 3, kind: output, shape index: {}]
  %s4 = sld [smem:[#allocation0]]
  $region34: #{tpu_custom_call.1} parent=0
    _
  %s6 = ssub.s32 1, %s4
  %s7 = scalar_select 0, %s6, %s4
  $region1: #{tpu_custom_call.1} parent=0
    #allocation2 [shape = 'u8[1024]{0}', space=vmem, size = 0x400, scoped, tag = 'input window, operand 0, single buffered']
    #allocation3 [shape = 's32[1]{0}', space=sflag, size = 0x4, scoped, tag = 'scoped memory for tpu_custom_call.1']
    #allocation4 [shape = 's32[1]{0}', space=sflag, size = 0x4, scoped, tag = 'scoped memory for tpu_custom_call.1']
    #allocation5 [shape = 'u8[1024]{0}', space=vmem, size = 0x400, scoped, tag = 'input window, operand 1, single buffered']
    #allocation6 [shape = 's32[1]{0}', space=sflag, size = 0x4, scoped, tag = 'scoped memory for tpu_custom_call.1']
    #allocation7 [shape = 'u8[143360]{0}', space=vmem, size = 0x23000, scoped, tag = 'input window, operand 2, single buffered']
    #allocation8 [shape = 'u8[1024]{0}', space=vmem, size = 0x400, scoped, tag = 'output window, operand 0, single buffered']
    %8 = vsyncpa [#allocation3], 0
    %9 = vsyncpa [#allocation6], 0
    %10 = vsyncpa [#allocation4], 0
    // Predicated region
    $region2: #{tpu_custom_call.1} parent=1 // pred_check
      _
    $region3: #{tpu_custom_call.1} parent=1 // pred_check_branch
      %12 = sbr.rel (0) target = $region5
    $region4: #{tpu_custom_call.1} parent=1 // pred_region
      %s14 = ssub.s32 32, 32
      %15 = vsyncadd [#allocation3], %s14
      %s17 = sshll.u32 [#allocation2], 4
      %s18 = int_to_ptr.vmem [resolvable:$true] %s17
      %20 = dma.hbm_to_vmem [thread:$0]  %s0, 32, %s18, [#allocation3]
    $region5: #{tpu_custom_call.1} parent=1 // pred_fallthru
      _
    // Predicated region
    $region6: #{tpu_custom_call.1} parent=1 // pred_check
      _
    $region7: #{tpu_custom_call.1} parent=1 // pred_check_branch
      %22 = sbr.rel (0) target = $region9
    $region8: #{tpu_custom_call.1} parent=1 // pred_region
      %s24 = ssub.s32 32, 32
      %25 = vsyncadd [#allocation6], %s24
      %s27 = sshll.u32 [#allocation5], 4
      %s28 = int_to_ptr.vmem [resolvable:$true] %s27
      %30 = dma.hbm_to_vmem [thread:$0]  %s1, 32, %s28, [#allocation6]
    $region9: #{tpu_custom_call.1} parent=1 // pred_fallthru
      _
    // Predicated region
    $region10: #{tpu_custom_call.1} parent=1 // pred_check
      _
    $region11: #{tpu_custom_call.1} parent=1 // pred_check_branch
      %32 = sbr.rel (0) target = $region13
    $region12: #{tpu_custom_call.1} parent=1 // pred_region
      %s34 = ssub.s32 4480, 4480
      %35 = vsyncadd [#allocation6], %s34
      %s36 = sshll.u32 [#allocation7], 4
      %s37 = int_to_ptr.vmem [resolvable:$true] %s36
      %42 = dma.hbm_to_vmem [thread:$0]  %s2, 4480, %s37, [#allocation6], 128, 128, 8
    $region13: #{tpu_custom_call.1} parent=1 // pred_fallthru
      _
    // Predicated region
    $region14: #{tpu_custom_call.1} parent=1 // pred_check
      _
    $region15: #{tpu_custom_call.1} parent=1 // pred_check_branch
      %44 = sbr.rel (0) target = $region17
    $region16: #{tpu_custom_call.1} parent=1 // pred_region
      %45 = dma.done [#allocation3], 32
    $region17: #{tpu_custom_call.1} parent=1 // pred_fallthru
      _
    // Predicated region
    $region18: #{tpu_custom_call.1} parent=1 // pred_check
      _
    $region19: #{tpu_custom_call.1} parent=1 // pred_check_branch
      %47 = sbr.rel (0) target = $region21
    $region20: #{tpu_custom_call.1} parent=1 // pred_region
      %48 = dma.done [#allocation6], 32
    $region21: #{tpu_custom_call.1} parent=1 // pred_fallthru
      _
    // Predicated region
    $region22: #{tpu_custom_call.1} parent=1 // pred_check
      _
    $region23: #{tpu_custom_call.1} parent=1 // pred_check_branch
      %50 = sbr.rel (0) target = $region25
    $region24: #{tpu_custom_call.1} parent=1 // pred_region
      %51 = dma.done [#allocation6], 4480
    $region25: #{tpu_custom_call.1} parent=1 // pred_fallthru
      _
    %v52 = vld [vmem:[#allocation2] sm:$0x3]
    %v53 = vld [vmem:[#allocation7] sm:$0xff]
    %v54 = vld [vmem:[#allocation5] sm:$0x3]
    %v55 = vld [vmem:[#allocation7 + $0x8] sm:$0xf]
    %vm56 = vcmask 31744
    %v58 = vsel %vm56, %v54, 0
    %vm60 = vcmask 1043456
    %v62 = vsel %vm60, %v55, 0
    %64 = vmatprep.subr.mxu0 0.0
    %65 = vmatpush1.msra.mxu0 0.0
    %66 = vmatprep.subr.mxu0 0.0
    %67 = vmatpush1.msra.mxu0 0.0
    %68 = vmatprep.subr.mxu0 0.0
    %69 = vmatpush1.msra.mxu0 0.0
    %70 = vmatprep.subr.mxu0 0.0
    %71 = vmatpush1.msra.mxu0 0.0
    %72 = vmatprep.subr.mxu0 0.0
    %73 = vmatpush1.msra.mxu0 0.0
    %74 = vmatprep.subr.mxu0 0.0
    %75 = vmatpush1.msra.mxu0 0.0
    %76 = vmatprep.subr.mxu0 0.0
    %77 = vmatpush1.msra.mxu0 0.0
    %78 = vmatprep.subr.mxu0 0.0
    %79 = vmatpush1.msra.mxu0 0.0
    %80 = vmatprep.subr.mxu0 0.0
    %81 = vmatpush1.msra.mxu0 0.0
    %82 = vmatprep.subr.mxu0 0.0
    %83 = vmatpush1.msra.mxu0 0.0
    %84 = vmatprep.subr.mxu0 0.0
    %85 = vmatpush1.msra.mxu0 0.0
    %86 = vmatprep.subr.mxu0 0.0
    %87 = vmatpush1.msra.mxu0 0.0
    %88 = vmatprep.subr.mxu0 0.0
    %89 = vmatpush1.msra.mxu0 0.0
    %90 = vmatprep.subr.mxu0 0.0
    %91 = vmatpush1.msra.mxu0 0.0
    %92 = vmatprep.subr.mxu0 0.0
    %93 = vmatpush1.msra.mxu0 0.0
    %94 = vmatprep.subr.mxu0 0.0
    %95 = vmatpush1.msra.mxu0 %v62
    %96 = vmatprep.subr.mxu0 0.0
    %97 = vmatpush2.msra.mxu0 0.0
    %98 = vmatprep.subr.mxu0 0.0
    %99 = vmatpush2.msra.mxu0 0.0
    %100 = vmatprep.subr.mxu0 0.0
    %101 = vmatpush2.msra.mxu0 0.0
    %102 = vmatprep.subr.mxu0 0.0
    %103 = vmatpush2.msra.mxu0 0.0
    %104 = vmatprep.subr.mxu0 0.0
    %105 = vmatpush2.msra.mxu0 0.0
    %106 = vmatprep.subr.mxu0 0.0
    %107 = vmatpush2.msra.mxu0 0.0
    %108 = vmatprep.subr.mxu0 0.0
    %109 = vmatpush2.msra.mxu0 0.0
    %110 = vmatprep.subr.mxu0 0.0
    %111 = vmatpush2.msra.mxu0 0.0
    %112 = vmatprep.subr.mxu0 0.0
    %113 = vmatpush2.msra.mxu0 0.0
    %114 = vmatprep.subr.mxu0 0.0
    %115 = vmatpush2.msra.mxu0 0.0
    %116 = vmatprep.subr.mxu0 0.0
    %117 = vmatpush2.msra.mxu0 0.0
    %118 = vmatprep.subr.mxu0 0.0
    %119 = vmatpush2.msra.mxu0 0.0
    %120 = vmatprep.subr.mxu0 0.0
    %121 = vmatpush2.msra.mxu0 0.0
    %122 = vmatprep.subr.mxu0 0.0
    %123 = vmatpush2.msra.mxu0 0.0
    %124 = vmatprep.subr.mxu0 0.0
    %125 = vmatpush2.msra.mxu0 0.0
    %126 = vmatprep.subr.mxu0 0.0
    %127 = vmatpush2.msra.mxu0 0.0
    %128 = vmatprep.mubr.f32.mxu0 0.0
    %129 = vmatmul.mubr.f32.gmra.mxu0 %v58
    %v130 = vpop.f32.mrf.mxu0
    %v131 = vadd.f32 0.0, %v130
    %v132 = vpop.f32.mrf.mxu0
    %133 = vdwg.mxu0
    %vm134 = vcmask 64512
    %v136 = vsel %vm134, %v52, 0
    %138 = vmatprep.subr.mxu0 0.0
    %139 = vmatpush1.msra.mxu0 0.0
    %140 = vmatprep.subr.mxu0 0.0
    %141 = vmatpush1.msra.mxu0 0.0
    %142 = vmatprep.subr.mxu0 0.0
    %143 = vmatpush1.msra.mxu0 0.0
    %144 = vmatprep.subr.mxu0 0.0
    %145 = vmatpush1.msra.mxu0 0.0
    %146 = vmatprep.subr.mxu0 0.0
    %147 = vmatpush1.msra.mxu0 0.0
    %148 = vmatprep.subr.mxu0 0.0
    %149 = vmatpush1.msra.mxu0 0.0
    %150 = vmatprep.subr.mxu0 0.0
    %151 = vmatpush1.msra.mxu0 0.0
    %152 = vmatprep.subr.mxu0 0.0
    %153 = vmatpush1.msra.mxu0 0.0
    %154 = vmatprep.subr.mxu0 0.0
    %155 = vmatpush1.msra.mxu0 0.0
    %156 = vmatprep.subr.mxu0 0.0
    %157 = vmatpush1.msra.mxu0 0.0
    %158 = vmatprep.subr.mxu0 0.0
    %159 = vmatpush1.msra.mxu0 0.0
    %160 = vmatprep.subr.mxu0 0.0
    %161 = vmatpush1.msra.mxu0 0.0
    %162 = vmatprep.subr.mxu0 0.0
    %163 = vmatpush1.msra.mxu0 0.0
    %164 = vmatprep.subr.mxu0 0.0
    %165 = vmatpush1.msra.mxu0 0.0
    %166 = vmatprep.subr.mxu0 0.0
    %167 = vmatpush1.msra.mxu0 0.0
    %168 = vmatprep.subr.mxu0 0.0
    %169 = vmatpush1.msra.mxu0 %v53
    %170 = vmatprep.subr.mxu0 0.0
    %171 = vmatpush2.msra.mxu0 0.0
    %172 = vmatprep.subr.mxu0 0.0
    %173 = vmatpush2.msra.mxu0 0.0
    %174 = vmatprep.subr.mxu0 0.0
    %175 = vmatpush2.msra.mxu0 0.0
    %176 = vmatprep.subr.mxu0 0.0
    %177 = vmatpush2.msra.mxu0 0.0
    %178 = vmatprep.subr.mxu0 0.0
    %179 = vmatpush2.msra.mxu0 0.0
    %180 = vmatprep.subr.mxu0 0.0
    %181 = vmatpush2.msra.mxu0 0.0
    %182 = vmatprep.subr.mxu0 0.0
    %183 = vmatpush2.msra.mxu0 0.0
    %184 = vmatprep.subr.mxu0 0.0
    %185 = vmatpush2.msra.mxu0 0.0
    %186 = vmatprep.subr.mxu0 0.0
    %187 = vmatpush2.msra.mxu0 0.0
    %188 = vmatprep.subr.mxu0 0.0
    %189 = vmatpush2.msra.mxu0 0.0
    %190 = vmatprep.subr.mxu0 0.0
    %191 = vmatpush2.msra.mxu0 0.0
    %192 = vmatprep.subr.mxu0 0.0
    %193 = vmatpush2.msra.mxu0 0.0
    %194 = vmatprep.subr.mxu0 0.0
    %195 = vmatpush2.msra.mxu0 0.0
    %196 = vmatprep.subr.mxu0 0.0
    %197 = vmatpush2.msra.mxu0 0.0
    %198 = vmatprep.subr.mxu0 0.0
    %199 = vmatpush2.msra.mxu0 0.0
    %200 = vmatprep.subr.mxu0 0.0
    %201 = vmatpush2.msra.mxu0 0.0
    %202 = vmatprep.mubr.f32.mxu0 0.0
    %203 = vmatmul.mubr.f32.gmra.mxu0 %v136
    %v204 = vpop.f32.mrf.mxu0
    %v205 = vadd.f32 %v131, %v204
    %v206 = vpop.f32.mrf.mxu0
    %207 = vdwg.mxu0
    %v208 = vld [vmem:[#allocation7 + $0x110] sm:$0x1]
    %v209 = vlaneseq
    %v210 = vshrl.u32 %v209, 7
    %v211 = vsub.s32 0, %v210
    %v212 = vrot.slane %v208, %v211
    %v213 = vadd.f32 %v205, %v212
    %v214 = vmax.f32 %v213, 0.0
    %v215 = vld [vmem:[#allocation7 + $0x10] sm:$0xff]
    %v216 = vld [vmem:[#allocation7 + $0x18] sm:$0xff]
    %v217 = vld [vmem:[#allocation7 + $0x20] sm:$0xff]
    %v218 = vld [vmem:[#allocation7 + $0x28] sm:$0xff]
    %v219 = vld [vmem:[#allocation7 + $0x30] sm:$0xff]
    %v220 = vld [vmem:[#allocation7 + $0x38] sm:$0xff]
    %v221 = vld [vmem:[#allocation7 + $0x40] sm:$0xff]
    %v222 = vld [vmem:[#allocation7 + $0x48] sm:$0xff]
    %v223 = vld [vmem:[#allocation7 + $0x50] sm:$0xff]
    %v224 = vld [vmem:[#allocation7 + $0x58] sm:$0xff]
    %v225 = vld [vmem:[#allocation7 + $0x60] sm:$0xff]
    %v226 = vld [vmem:[#allocation7 + $0x68] sm:$0xff]
    %v227 = vld [vmem:[#allocation7 + $0x70] sm:$0xff]
    %v228 = vld [vmem:[#allocation7 + $0x78] sm:$0xff]
    %v229 = vld [vmem:[#allocation7 + $0x80] sm:$0xff]
    %v230 = vld [vmem:[#allocation7 + $0x88] sm:$0xff]
    %v231 = vld [vmem:[#allocation7 + $0x111] sm:$0x1]
    %v232 = vlaneseq
    %v233 = vshrl.u32 %v232, 7
    %v234 = vsub.s32 0, %v233
    %v235 = vrot.slane %v231, %v234
    %236 = vmatprep.subr.mxu0 0.0
    %237 = vmatpush1.msra.mxu0 %v230
    %238 = vmatprep.subr.mxu0 0.0
    %239 = vmatpush1.msra.mxu0 %v229
    %240 = vmatprep.subr.mxu0 0.0
    %241 = vmatpush1.msra.mxu0 %v228
    %242 = vmatprep.subr.mxu0 0.0
    %243 = vmatpush1.msra.mxu0 %v227
    %244 = vmatprep.subr.mxu0 0.0
    %245 = vmatpush1.msra.mxu0 %v226
    %246 = vmatprep.subr.mxu0 0.0
    %247 = vmatpush1.msra.mxu0 %v225
    %248 = vmatprep.subr.mxu0 0.0
    %249 = vmatpush1.msra.mxu0 %v224
    %250 = vmatprep.subr.mxu0 0.0
    %251 = vmatpush1.msra.mxu0 %v223
    %252 = vmatprep.subr.mxu0 0.0
    %253 = vmatpush1.msra.mxu0 %v222
    %254 = vmatprep.subr.mxu0 0.0
    %255 = vmatpush1.msra.mxu0 %v221
    %256 = vmatprep.subr.mxu0 0.0
    %257 = vmatpush1.msra.mxu0 %v220
    %258 = vmatprep.subr.mxu0 0.0
    %259 = vmatpush1.msra.mxu0 %v219
    %260 = vmatprep.subr.mxu0 0.0
    %261 = vmatpush1.msra.mxu0 %v218
    %262 = vmatprep.subr.mxu0 0.0
    %263 = vmatpush1.msra.mxu0 %v217
    %264 = vmatprep.subr.mxu0 0.0
    %265 = vmatpush1.msra.mxu0 %v216
    %266 = vmatprep.subr.mxu0 0.0
    %267 = vmatpush1.msra.mxu0 %v215
    %268 = vmatprep.subr.mxu0 0.0
    %269 = vmatpush2.msra.mxu0 0.0
    %270 = vmatprep.subr.mxu0 0.0
    %271 = vmatpush2.msra.mxu0 0.0
    %272 = vmatprep.subr.mxu0 0.0
    %273 = vmatpush2.msra.mxu0 0.0
    %274 = vmatprep.subr.mxu0 0.0
    %275 = vmatpush2.msra.mxu0 0.0
    %276 = vmatprep.subr.mxu0 0.0
    %277 = vmatpush2.msra.mxu0 0.0
    %278 = vmatprep.subr.mxu0 0.0
    %279 = vmatpush2.msra.mxu0 0.0
    %280 = vmatprep.subr.mxu0 0.0
    %281 = vmatpush2.msra.mxu0 0.0
    %282 = vmatprep.subr.mxu0 0.0
    %283 = vmatpush2.msra.mxu0 0.0
    %284 = vmatprep.subr.mxu0 0.0
    %285 = vmatpush2.msra.mxu0 0.0
    %286 = vmatprep.subr.mxu0 0.0
    %287 = vmatpush2.msra.mxu0 0.0
    %288 = vmatprep.subr.mxu0 0.0
    %289 = vmatpush2.msra.mxu0 0.0
    %290 = vmatprep.subr.mxu0 0.0
    %291 = vmatpush2.msra.mxu0 0.0
    %292 = vmatprep.subr.mxu0 0.0
    %293 = vmatpush2.msra.mxu0 0.0
    %294 = vmatprep.subr.mxu0 0.0
    %295 = vmatpush2.msra.mxu0 0.0
    %296 = vmatprep.subr.mxu0 0.0
    %297 = vmatpush2.msra.mxu0 0.0
    %298 = vmatprep.subr.mxu0 0.0
    %299 = vmatpush2.msra.mxu0 0.0
    %300 = vmatprep.mubr.f32.mxu0 0.0
    %301 = vmatmul.mubr.f32.gmra.mxu0 %v214
    %v302 = vpop.f32.mrf.mxu0
    %v303 = vadd.f32 %v235, %v302
    %v304 = vpop.f32.mrf.mxu0
    %305 = vdwg.mxu0
    %v306 = vmax.f32 %v303, 0.0
    %v307 = vld [vmem:[#allocation7 + $0x90] sm:$0xff]
    %v308 = vld [vmem:[#allocation7 + $0x98] sm:$0xff]
    %v309 = vld [vmem:[#allocation7 + $0xa0] sm:$0xff]
    %v310 = vld [vmem:[#allocation7 + $0xa8] sm:$0xff]
    %v311 = vld [vmem:[#allocation7 + $0xb0] sm:$0xff]
    %v312 = vld [vmem:[#allocation7 + $0xb8] sm:$0xff]
    %v313 = vld [vmem:[#allocation7 + $0xc0] sm:$0xff]
    %v314 = vld [vmem:[#allocation7 + $0xc8] sm:$0xff]
    %v315 = vld [vmem:[#allocation7 + $0xd0] sm:$0xff]
    %v316 = vld [vmem:[#allocation7 + $0xd8] sm:$0xff]
    %v317 = vld [vmem:[#allocation7 + $0xe0] sm:$0xff]
    %v318 = vld [vmem:[#allocation7 + $0xe8] sm:$0xff]
    %v319 = vld [vmem:[#allocation7 + $0xf0] sm:$0xff]
    %v320 = vld [vmem:[#allocation7 + $0xf8] sm:$0xff]
    %v321 = vld [vmem:[#allocation7 + $0x100] sm:$0xff]
    %v322 = vld [vmem:[#allocation7 + $0x108] sm:$0xff]
    %v323 = vld [vmem:[#allocation7 + $0x112] sm:$0x1]
    %v324 = vlaneseq
    %v325 = vshrl.u32 %v324, 7
    %v326 = vsub.s32 0, %v325
    %v327 = vrot.slane %v323, %v326
    %328 = vmatprep.subr.mxu0 0.0
    %329 = vmatpush1.msra.mxu0 %v322
    %330 = vmatprep.subr.mxu0 0.0
    %331 = vmatpush1.msra.mxu0 %v321
    %332 = vmatprep.subr.mxu0 0.0
    %333 = vmatpush1.msra.mxu0 %v320
    %334 = vmatprep.subr.mxu0 0.0
    %335 = vmatpush1.msra.mxu0 %v319
    %336 = vmatprep.subr.mxu0 0.0
    %337 = vmatpush1.msra.mxu0 %v318
    %338 = vmatprep.subr.mxu0 0.0
    %339 = vmatpush1.msra.mxu0 %v317
    %340 = vmatprep.subr.mxu0 0.0
    %341 = vmatpush1.msra.mxu0 %v316
    %342 = vmatprep.subr.mxu0 0.0
    %343 = vmatpush1.msra.mxu0 %v315
    %344 = vmatprep.subr.mxu0 0.0
    %345 = vmatpush1.msra.mxu0 %v314
    %346 = vmatprep.subr.mxu0 0.0
    %347 = vmatpush1.msra.mxu0 %v313
    %348 = vmatprep.subr.mxu0 0.0
    %349 = vmatpush1.msra.mxu0 %v312
    %350 = vmatprep.subr.mxu0 0.0
    %351 = vmatpush1.msra.mxu0 %v311
    %352 = vmatprep.subr.mxu0 0.0
    %353 = vmatpush1.msra.mxu0 %v310
    %354 = vmatprep.subr.mxu0 0.0
    %355 = vmatpush1.msra.mxu0 %v309
    %356 = vmatprep.subr.mxu0 0.0
    %357 = vmatpush1.msra.mxu0 %v308
    %358 = vmatprep.subr.mxu0 0.0
    %359 = vmatpush1.msra.mxu0 %v307
    %360 = vmatprep.subr.mxu0 0.0
    %361 = vmatpush2.msra.mxu0 0.0
    %362 = vmatprep.subr.mxu0 0.0
    %363 = vmatpush2.msra.mxu0 0.0
    %364 = vmatprep.subr.mxu0 0.0
    %365 = vmatpush2.msra.mxu0 0.0
    %366 = vmatprep.subr.mxu0 0.0
    %367 = vmatpush2.msra.mxu0 0.0
    %368 = vmatprep.subr.mxu0 0.0
    %369 = vmatpush2.msra.mxu0 0.0
    %370 = vmatprep.subr.mxu0 0.0
    %371 = vmatpush2.msra.mxu0 0.0
    %372 = vmatprep.subr.mxu0 0.0
    %373 = vmatpush2.msra.mxu0 0.0
    %374 = vmatprep.subr.mxu0 0.0
    %375 = vmatpush2.msra.mxu0 0.0
    %376 = vmatprep.subr.mxu0 0.0
    %377 = vmatpush2.msra.mxu0 0.0
    %378 = vmatprep.subr.mxu0 0.0
    %379 = vmatpush2.msra.mxu0 0.0
    %380 = vmatprep.subr.mxu0 0.0
    %381 = vmatpush2.msra.mxu0 0.0
    %382 = vmatprep.subr.mxu0 0.0
    %383 = vmatpush2.msra.mxu0 0.0
    %384 = vmatprep.subr.mxu0 0.0
    %385 = vmatpush2.msra.mxu0 0.0
    %386 = vmatprep.subr.mxu0 0.0
    %387 = vmatpush2.msra.mxu0 0.0
    %388 = vmatprep.subr.mxu0 0.0
    %389 = vmatpush2.msra.mxu0 0.0
    %390 = vmatprep.subr.mxu0 0.0
    %391 = vmatpush2.msra.mxu0 0.0
    %392 = vmatprep.mubr.f32.mxu0 0.0
    %393 = vmatmul.mubr.f32.gmra.mxu0 %v306
    %v394 = vpop.f32.mrf.mxu0
    %v395 = vadd.f32 %v327, %v394
    %v396 = vpop.f32.mrf.mxu0
    %397 = vdwg.mxu0
    %vm398 = vcmask 9216
    %399 = vst.msk [vmem:[#allocation8] sm:$0x3] %vm398, %v395
    // Predicated region
    $region26: #{tpu_custom_call.1} parent=1 // pred_check
      _
    $region27: #{tpu_custom_call.1} parent=1 // pred_check_branch
      %401 = sbr.rel (0) target = $region29
    $region28: #{tpu_custom_call.1} parent=1 // pred_region
      %s403 = ssub.s32 32, 32
      %404 = vsyncadd [#allocation4], %s403
      %s406 = sshll.u32 [#allocation8], 4
      %s407 = int_to_ptr.vmem [resolvable:$true] %s406
      %409 = dma.vmem_to_hbm [thread:$0]  %s407, 32, %s3, [#allocation4]
    $region29: #{tpu_custom_call.1} parent=1 // pred_fallthru
      _
    // Predicated region
    $region30: #{tpu_custom_call.1} parent=1 // pred_check
      _
    $region31: #{tpu_custom_call.1} parent=1 // pred_check_branch
      %411 = sbr.rel (0) target = $region33
    $region32: #{tpu_custom_call.1} parent=1 // pred_region
      %412 = dma.done [#allocation4], 32
    $region33: #{tpu_custom_call.1} parent=1 // pred_fallthru
      _
    %413 = vsyncpa [#allocation3], 1
    %414 = vsyncpa [#allocation6], 1
    %415 = vsyncpa [#allocation4], 1

</llo_original>
